<compile_context>
chip_gen: v7x
topology: tpu7x:2x2x1
jax: 0.10.0
libtpu: 0.0.40
codegen_flags: <defaults>
</compile_context>

<pallas_src>
import jax
import jax.numpy as jnp
from jax.experimental import pallas as pl
from jax.experimental.pallas import tpu as pltpu

HIDDEN_SIZE = 16
INPUT_SIZE = 1


def _rnn_kernel(x_ref, whh_ref, pp_ref, out_ref):
    # x_ref:   (T*B, 1) f32  time-major, batch-minor input (I == 1 squeezed)
    # whh_ref: (H, H)   f32  W_hh^T (loop-invariant recurrent weight)
    # pp_ref:  (4, H)   f32  packed small params:
    #            row 0: W_ih^T as a row     (valid only because I == 1)
    #            row 1: b_ih + b_hh         (pre-fused RNN bias)
    #            row 2: W_fc as a row       (final Linear weight)
    #            row 3: b_fc broadcast across lanes
    # out_ref: (B, 1)   f32
    B = out_ref.shape[0]
    T = x_ref.shape[0] // B

    wih = pp_ref[0:1, :]        # (1, H)
    bias = pp_ref[1:2, :]       # (1, H)
    wfc = pp_ref[2:3, :]        # (1, H)
    bfc = pp_ref[3:4, 0:1]      # (1, 1)

    # Input projection for ALL timesteps, computed once in a lane/sublane-dense
    # layout and hoisted off the serial recurrence. With I == 1 it is just a
    # VPU broadcast multiply + add: (T*B, 1) * (1, H) + (1, H) -> (T*B, H).
    xproj = x_ref[...] * wih + bias

    # Loop-invariant recurrent weight, loaded once.
    whh = whh_ref[...]

    # t = 0: h_prev == 0, so the recurrent matmul is skipped.
    h = jnp.tanh(xproj[0:B, :])

    # Static unroll over the short time axis; h stays in vregs, exactly one MXU
    # dot (single bf16 pass, f32 accumulate) + one EUP tanh + one VPU add per
    # step on the critical path.
    # TODO(synk): if H grows, keep W_hh^T resident in the MXU across steps with
    # pltpu.matmul_push_rhs / matmul_acc_lhs / matmul_pop to drop the per-step
    # RHS re-push from the serial chain.
    for t in range(1, T):
        h = jnp.tanh(
            xproj[t * B:(t + 1) * B, :]
            + jnp.dot(h, whh,
                      preferred_element_type=jnp.float32,
                      precision=jax.lax.Precision.DEFAULT))

    # Final Linear(H, 1) on the last hidden state: VPU multiply + lane reduce
    # (cheaper than a second MXU push/pop at H == 16, and needs no (H,1) operand).
    out = jnp.sum(h * wfc, axis=-1, keepdims=True) + bfc
    out_ref[...] = out.astype(out_ref.dtype)


@jax.jit
def simple_rnn_forward(x, params):
    """x: (B, T, I) float32, batch_first like PyTorch nn.RNN. Returns (B, 1)."""
    B, T, I = x.shape
    H = params["W_hh"].shape[0]
    assert I == INPUT_SIZE == 1, "kernel specialises the module's input_size == 1"

    # The whole forward is jitted, so these tiny layout / packing ops fuse into
    # one dispatch rather than several separately launched XLA kernels.
    x_flat = jnp.transpose(x, (1, 0, 2)).reshape(T * B, 1)       # time-major

    packed = jnp.stack(
        [
            params["W_ih"].reshape(H).astype(jnp.float32),        # W_ih^T row
            (params["b_ih"] + params["b_hh"]).astype(jnp.float32),  # fused bias
            params["W_fc"].reshape(H).astype(jnp.float32),        # W_fc row
            jnp.broadcast_to(params["b_fc"].reshape(1), (H,)).astype(jnp.float32),
        ],
        axis=0,
    )                                                             # (4, H)

    whh_t = params["W_hh"].T.astype(jnp.float32)                  # (H, H)

    vmem = pl.BlockSpec(memory_space=pltpu.MemorySpace.VMEM)

    # TODO(synk): for long T / large B, tile over T (pltpu.emit_pipeline) and
    # add a leading "parallel" batch grid axis (2 TCs on v7x); size tiles for
    # v7x's 64 MiB VMEM and set vmem_limit_bytes. Unnecessary at these shapes.
    return pl.pallas_call(
        _rnn_kernel,
        out_shape=jax.ShapeDtypeStruct((B, 1), jnp.float32),
        in_specs=[vmem, vmem, vmem],
        out_specs=vmem,
    )(x_flat, whh_t, packed)


def init_params(key, input_size=INPUT_SIZE, hidden_size=HIDDEN_SIZE):
    """Deterministic init matching PyTorch nn.RNN / nn.Linear shapes."""
    k = jax.random.split(key, 6)
    s = 1.0 / jnp.sqrt(hidden_size)
    return {
        "W_ih": jax.random.uniform(k[0], (hidden_size, input_size),
                                   minval=-s, maxval=s, dtype=jnp.float32),
        "W_hh": jax.random.uniform(k[1], (hidden_size, hidden_size),
                                   minval=-s, maxval=s, dtype=jnp.float32),
        "b_ih": jax.random.uniform(k[2], (hidden_size,),
                                   minval=-s, maxval=s, dtype=jnp.float32),
        "b_hh": jax.random.uniform(k[3], (hidden_size,),
                                   minval=-s, maxval=s, dtype=jnp.float32),
        "W_fc": jax.random.uniform(k[4], (1, hidden_size),
                                   minval=-s, maxval=s, dtype=jnp.float32),
        "b_fc": jax.random.uniform(k[5], (1,),
                                   minval=-s, maxval=s, dtype=jnp.float32),
    }


def simple_rnn_reference(x, params):
    """Pure-JAX reference mirroring PyTorch nn.RNN(tanh) + Linear."""
    B, T, I = x.shape
    H = params["W_hh"].shape[0]
    h = jnp.zeros((B, H), jnp.float32)
    for t in range(T):
        h = jnp.tanh(x[:, t, :] @ params["W_ih"].T + params["b_ih"]
                     + h @ params["W_hh"].T + params["b_hh"])
    return h @ params["W_fc"].T + params["b_fc"]


if __name__ == "__main__":
    key = jax.random.PRNGKey(0)
    k_x, k_p = jax.random.split(key)

    B, T, I = 2, 8, INPUT_SIZE
    x = jax.random.normal(k_x, (B, T, I), dtype=jnp.float32)
    params = init_params(k_p)

    out = simple_rnn_forward(x, params)
    out = jax.block_until_ready(out)

    ref = simple_rnn_reference(x, params)
    assert out.shape == (B, 1)
    # Tolerance documents the single bf16-pass MXU dot (precision=DEFAULT);
    # tanh keeps magnitudes O(1), so absolute error stays well below 2e-3.
    assert jnp.allclose(out, ref, atol=2e-3, rtol=2e-3), (out, ref)

    print("KERNEL_OK")
</pallas_src>

<mosaic_0001>
module attributes {stable_mosaic.version = 11 : i64} {
  func.func @_rnn_kernel(%arg0: memref<16x1xf32, #tpu.memory_space<vmem>>, %arg1: memref<16x16xf32, #tpu.memory_space<vmem>>, %arg2: memref<4x16xf32, #tpu.memory_space<vmem>>, %arg3: memref<2x1xf32, #tpu.memory_space<vmem>>) attributes {dimension_semantics = [], scalar_prefetch = 0 : i64, scratch_operands = 0 : i64, tpu.core_type = #tpu.core_type<tc>} {
    %c0 = arith.constant 0 : index
    %c0_0 = arith.constant 0 : index
    %0 = vector.load %arg2[%c0, %c0_0] : memref<4x16xf32, #tpu.memory_space<vmem>>, vector<1x16xf32>
    %c1 = arith.constant 1 : index
    %c0_1 = arith.constant 0 : index
    %1 = vector.load %arg2[%c1, %c0_1] : memref<4x16xf32, #tpu.memory_space<vmem>>, vector<1x16xf32>
    %c2 = arith.constant 2 : index
    %c0_2 = arith.constant 0 : index
    %2 = vector.load %arg2[%c2, %c0_2] : memref<4x16xf32, #tpu.memory_space<vmem>>, vector<1x16xf32>
    %c3 = arith.constant 3 : index
    %c0_3 = arith.constant 0 : index
    %3 = vector.load %arg2[%c3, %c0_3] : memref<4x16xf32, #tpu.memory_space<vmem>>, vector<1x1xf32>
    %c0_4 = arith.constant 0 : index
    %c0_5 = arith.constant 0 : index
    %4 = vector.load %arg0[%c0_4, %c0_5] : memref<16x1xf32, #tpu.memory_space<vmem>>, vector<16x1xf32>
    %5 = vector.broadcast %4 : vector<16x1xf32> to vector<16x16xf32>
    %6 = vector.broadcast %0 : vector<1x16xf32> to vector<16x16xf32>
    %7 = arith.mulf %5, %6 : vector<16x16xf32>
    %8 = vector.broadcast %1 : vector<1x16xf32> to vector<16x16xf32>
    %9 = arith.addf %7, %8 : vector<16x16xf32>
    %c0_6 = arith.constant 0 : index
    %c0_7 = arith.constant 0 : index
    %10 = vector.load %arg1[%c0_6, %c0_7] : memref<16x16xf32, #tpu.memory_space<vmem>>, vector<16x16xf32>
    %11 = vector.extract_strided_slice %9 {offsets = [0, 0], sizes = [2, 16], strides = [1, 1]} : vector<16x16xf32> to vector<2x16xf32>
    %12 = math.tanh %11 : vector<2x16xf32>
    %13 = vector.extract_strided_slice %9 {offsets = [2, 0], sizes = [2, 16], strides = [1, 1]} : vector<16x16xf32> to vector<2x16xf32>
    %cst = arith.constant dense<0.000000e+00> : vector<2x16xf32>
    %14 = tpu.matmul %12, %10, %cst {dimension_numbers = #tpu.dot_dimension_numbers<[1], [0], [0], [1], [0, 0, 1, 1], [], []>} : vector<2x16xf32>, vector<16x16xf32>, vector<2x16xf32> -> vector<2x16xf32>
    %15 = arith.addf %13, %14 : vector<2x16xf32>
    %16 = math.tanh %15 : vector<2x16xf32>
    %17 = vector.extract_strided_slice %9 {offsets = [4, 0], sizes = [2, 16], strides = [1, 1]} : vector<16x16xf32> to vector<2x16xf32>
    %cst_8 = arith.constant dense<0.000000e+00> : vector<2x16xf32>
    %18 = tpu.matmul %16, %10, %cst_8 {dimension_numbers = #tpu.dot_dimension_numbers<[1], [0], [0], [1], [0, 0, 1, 1], [], []>} : vector<2x16xf32>, vector<16x16xf32>, vector<2x16xf32> -> vector<2x16xf32>
    %19 = arith.addf %17, %18 : vector<2x16xf32>
    %20 = math.tanh %19 : vector<2x16xf32>
    %21 = vector.extract_strided_slice %9 {offsets = [6, 0], sizes = [2, 16], strides = [1, 1]} : vector<16x16xf32> to vector<2x16xf32>
    %cst_9 = arith.constant dense<0.000000e+00> : vector<2x16xf32>
    %22 = tpu.matmul %20, %10, %cst_9 {dimension_numbers = #tpu.dot_dimension_numbers<[1], [0], [0], [1], [0, 0, 1, 1], [], []>} : vector<2x16xf32>, vector<16x16xf32>, vector<2x16xf32> -> vector<2x16xf32>
    %23 = arith.addf %21, %22 : vector<2x16xf32>
    %24 = math.tanh %23 : vector<2x16xf32>
    %25 = vector.extract_strided_slice %9 {offsets = [8, 0], sizes = [2, 16], strides = [1, 1]} : vector<16x16xf32> to vector<2x16xf32>
    %cst_10 = arith.constant dense<0.000000e+00> : vector<2x16xf32>
    %26 = tpu.matmul %24, %10, %cst_10 {dimension_numbers = #tpu.dot_dimension_numbers<[1], [0], [0], [1], [0, 0, 1, 1], [], []>} : vector<2x16xf32>, vector<16x16xf32>, vector<2x16xf32> -> vector<2x16xf32>
    %27 = arith.addf %25, %26 : vector<2x16xf32>
    %28 = math.tanh %27 : vector<2x16xf32>
    %29 = vector.extract_strided_slice %9 {offsets = [10, 0], sizes = [2, 16], strides = [1, 1]} : vector<16x16xf32> to vector<2x16xf32>
    %cst_11 = arith.constant dense<0.000000e+00> : vector<2x16xf32>
    %30 = tpu.matmul %28, %10, %cst_11 {dimension_numbers = #tpu.dot_dimension_numbers<[1], [0], [0], [1], [0, 0, 1, 1], [], []>} : vector<2x16xf32>, vector<16x16xf32>, vector<2x16xf32> -> vector<2x16xf32>
    %31 = arith.addf %29, %30 : vector<2x16xf32>
    %32 = math.tanh %31 : vector<2x16xf32>
    %33 = vector.extract_strided_slice %9 {offsets = [12, 0], sizes = [2, 16], strides = [1, 1]} : vector<16x16xf32> to vector<2x16xf32>
    %cst_12 = arith.constant dense<0.000000e+00> : vector<2x16xf32>
    %34 = tpu.matmul %32, %10, %cst_12 {dimension_numbers = #tpu.dot_dimension_numbers<[1], [0], [0], [1], [0, 0, 1, 1], [], []>} : vector<2x16xf32>, vector<16x16xf32>, vector<2x16xf32> -> vector<2x16xf32>
    %35 = arith.addf %33, %34 : vector<2x16xf32>
    %36 = math.tanh %35 : vector<2x16xf32>
    %37 = vector.extract_strided_slice %9 {offsets = [14, 0], sizes = [2, 16], strides = [1, 1]} : vector<16x16xf32> to vector<2x16xf32>
    %cst_13 = arith.constant dense<0.000000e+00> : vector<2x16xf32>
    %38 = tpu.matmul %36, %10, %cst_13 {dimension_numbers = #tpu.dot_dimension_numbers<[1], [0], [0], [1], [0, 0, 1, 1], [], []>} : vector<2x16xf32>, vector<16x16xf32>, vector<2x16xf32> -> vector<2x16xf32>
    %39 = arith.addf %37, %38 : vector<2x16xf32>
    %40 = math.tanh %39 : vector<2x16xf32>
    %41 = vector.broadcast %2 : vector<1x16xf32> to vector<2x16xf32>
    %42 = arith.mulf %40, %41 : vector<2x16xf32>
    %cst_14 = arith.constant dense<0.000000e+00> : vector<2xf32>
    %43 = vector.multi_reduction <add>, %42, %cst_14 [1] : vector<2x16xf32> to vector<2xf32>
    %44 = vector.shape_cast %43 : vector<2xf32> to vector<2x1xf32>
    %45 = vector.broadcast %3 : vector<1x1xf32> to vector<2x1xf32>
    %46 = arith.addf %44, %45 : vector<2x1xf32>
    %c0_15 = arith.constant 0 : index
    %c0_16 = arith.constant 0 : index
    %47 = vector.load %arg3[%c0_15, %c0_16] : memref<2x1xf32, #tpu.memory_space<vmem>>, vector<2x1xf32>
    tpu.vector_store %arg3[%c0_15, %c0_16], %46 {strides = array<i32>} : memref<2x1xf32, #tpu.memory_space<vmem>>, vector<2x1xf32>,
    return
  }
}

</mosaic_0001>

<llo_original>
// kernel: simple_rnn_forward.1
$region0: #{simple_rnn_forward.1}
  #allocation0 [shape = 'u32[]', space=smem, size = 0x4, offset = 0x4, fixed_abs, tag = 'smem constant byte address 0x4 - core index']
  #allocation1 [shape = 'u32[144,128]{1,0:T(1,128)}', space=vmem, size = 0x12000, scoped, tag = 'internal scratch']
  %s0 = inlined_call_operand.vmem [shape: f32[16,1], index: 0, kind: input, shape index: {}]
  %s1 = inlined_call_operand.vmem [shape: f32[16,16], index: 1, kind: input, shape index: {}]
  %s2 = inlined_call_operand.vmem [shape: f32[4,16], index: 2, kind: input, shape index: {}]
  %s3 = inlined_call_operand.vmem [shape: f32[2,1], index: 3, kind: output, shape index: {}]
  %s4 = sld [smem:[#allocation0]]
  $region22: #{simple_rnn_forward.1} parent=0
    _
  %s6 = ssub.s32 1, %s4
  %s7 = scalar_select 0, %s6, %s4
  // Predicated region
  $region2: #{simple_rnn_forward.1} parent=0 // pred_check
    _
  $region3: #{simple_rnn_forward.1} parent=0 // pred_check_branch
    %9 = sbr.rel (0) target = $region5
  $region4: #{simple_rnn_forward.1} parent=0 // pred_region
    _
  $region5: #{simple_rnn_forward.1} parent=0 // pred_fallthru
    _
  // Predicated region
  $region6: #{simple_rnn_forward.1} parent=0 // pred_check
    _
  $region7: #{simple_rnn_forward.1} parent=0 // pred_check_branch
    %11 = sbr.rel (0) target = $region9
  $region8: #{simple_rnn_forward.1} parent=0 // pred_region
    _
  $region9: #{simple_rnn_forward.1} parent=0 // pred_fallthru
    _
  // Predicated region
  $region10: #{simple_rnn_forward.1} parent=0 // pred_check
    _
  $region11: #{simple_rnn_forward.1} parent=0 // pred_check_branch
    %13 = sbr.rel (0) target = $region13
  $region12: #{simple_rnn_forward.1} parent=0 // pred_region
    _
  $region13: #{simple_rnn_forward.1} parent=0 // pred_fallthru
    _
  %v14 = vld [vmem:[%s2] sm:$0x1]
  %v15 = vld [vmem:[%s2 + $0x1] sm:$0x1]
  %v16 = vld [vmem:[%s2 + $0x2] sm:$0x1]
  %v17 = vld [vmem:[%s2 + $0x3] sm:$0x1]
  %v18 = vld [vmem:[%s0] sm:$0xff]
  %v19 = vld [vmem:[%s0 + $0x8] sm:$0xff]
  %21 = vset.pattern.permute.xlu0 0
  %22 = vperm.xlu0 %21, %v18
  %v23 = vpop.permute.xlu0 %22
  %26 = vset.pattern.permute.xlu0 0
  %27 = vperm.xlu0 %26, %v19
  %v28 = vpop.permute.xlu0 %27
  %v30 = vlaneseq
  %v31 = vshrl.u32 %v30, 7
  %v32 = vsub.s32 0, %v31
  %v33 = vrot.slane %v14, %v32
  %v34 = vmul.f32 %v23, %v33
  %v35 = vmul.f32 %v28, %v33
  %v36 = vlaneseq
  %v37 = vshrl.u32 %v36, 7
  %v38 = vsub.s32 0, %v37
  %v39 = vrot.slane %v15, %v38
  %v40 = vadd.f32 %v34, %v39
  %v41 = vadd.f32 %v35, %v39
  %v42 = vld [vmem:[%s1] sm:$0xff]
  %v43 = vld [vmem:[%s1 + $0x8] sm:$0xff]
  %v44 = vtanh.pop %v40
  %vm45 = vcmask 130048
  %v47 = vsel %vm45, %v44, 0
  %49 = vmatprep.subr.mxu0 0.0
  %50 = vmatpush1.msra.mxu0 %v42
  %51 = vmatprep.subr.mxu0 0.0
  %52 = vmatpush1.msra.mxu0 %v43
  %53 = vmatprep.subr.mxu0 0.0
  %54 = vmatpush1.msra.mxu0 0.0
  %55 = vmatprep.subr.mxu0 0.0
  %56 = vmatpush1.msra.mxu0 0.0
  %57 = vmatprep.subr.mxu0 0.0
  %58 = vmatpush1.msra.mxu0 0.0
  %59 = vmatprep.subr.mxu0 0.0
  %60 = vmatpush1.msra.mxu0 0.0
  %61 = vmatprep.subr.mxu0 0.0
  %62 = vmatpush1.msra.mxu0 0.0
  %63 = vmatprep.subr.mxu0 0.0
  %64 = vmatpush1.msra.mxu0 0.0
  %65 = vmatprep.subr.mxu0 0.0
  %66 = vmatpush1.msra.mxu0 0.0
  %67 = vmatprep.subr.mxu0 0.0
  %68 = vmatpush1.msra.mxu0 0.0
  %69 = vmatprep.subr.mxu0 0.0
  %70 = vmatpush1.msra.mxu0 0.0
  %71 = vmatprep.subr.mxu0 0.0
  %72 = vmatpush1.msra.mxu0 0.0
  %73 = vmatprep.subr.mxu0 0.0
  %74 = vmatpush1.msra.mxu0 0.0
  %75 = vmatprep.subr.mxu0 0.0
  %76 = vmatpush1.msra.mxu0 0.0
  %77 = vmatprep.subr.mxu0 0.0
  %78 = vmatpush1.msra.mxu0 0.0
  %79 = vmatprep.subr.mxu0 0.0
  %80 = vmatpush1.msra.mxu0 0.0
  %81 = vmatprep.subr.mxu0 0.0
  %82 = vmatpush1.msra.mxu0 0.0
  %83 = vmatprep.subr.mxu0 0.0
  %84 = vmatpush1.msra.mxu0 0.0
  %85 = vmatprep.subr.mxu0 0.0
  %86 = vmatpush1.msra.mxu0 0.0
  %87 = vmatprep.subr.mxu0 0.0
  %88 = vmatpush1.msra.mxu0 0.0
  %89 = vmatprep.subr.mxu0 0.0
  %90 = vmatpush1.msra.mxu0 0.0
  %91 = vmatprep.subr.mxu0 0.0
  %92 = vmatpush1.msra.mxu0 0.0
  %93 = vmatprep.subr.mxu0 0.0
  %94 = vmatpush1.msra.mxu0 0.0
  %95 = vmatprep.subr.mxu0 0.0
  %96 = vmatpush1.msra.mxu0 0.0
  %97 = vmatprep.subr.mxu0 0.0
  %98 = vmatpush1.msra.mxu0 0.0
  %99 = vmatprep.subr.mxu0 0.0
  %100 = vmatpush1.msra.mxu0 0.0
  %101 = vmatprep.subr.mxu0 0.0
  %102 = vmatpush1.msra.mxu0 0.0
  %103 = vmatprep.subr.mxu0 0.0
  %104 = vmatpush1.msra.mxu0 0.0
  %105 = vmatprep.subr.mxu0 0.0
  %106 = vmatpush1.msra.mxu0 0.0
  %107 = vmatprep.subr.mxu0 0.0
  %108 = vmatpush1.msra.mxu0 0.0
  %109 = vmatprep.subr.mxu0 0.0
  %110 = vmatpush1.msra.mxu0 0.0
  %111 = vmatprep.subr.mxu0 0.0
  %112 = vmatpush1.msra.mxu0 0.0
  %113 = vmatprep.mubr.f32.mxu0 0.0
  %114 = vmatmul.mubr.f32.gmra.mrb[0].mxu0 %v47
  %v115 = vpop.f32.mrb[0].mxu0
  %v116 = vadd.f32 0.0, %v115
  %v117 = vpop.f32.mrb[0].mxu0
  %118 = vdwg.mxu0
  %v120 = vrot.slane %v116, 6
  %v122 = vadd.f32 %v40, %v120
  %v123 = vtanh.pop %v122
  %v125 = vrot.slane %v123, 2
  %v126 = vsel %vm45, %v125, 0
  %128 = vmatprep.subr.mxu0 0.0
  %129 = vmatpush1.msra.mxu0 %v42
  %130 = vmatprep.subr.mxu0 0.0
  %131 = vmatpush1.msra.mxu0 %v43
  %132 = vmatprep.subr.mxu0 0.0
  %133 = vmatpush1.msra.mxu0 0.0
  %134 = vmatprep.subr.mxu0 0.0
  %135 = vmatpush1.msra.mxu0 0.0
  %136 = vmatprep.subr.mxu0 0.0
  %137 = vmatpush1.msra.mxu0 0.0
  %138 = vmatprep.subr.mxu0 0.0
  %139 = vmatpush1.msra.mxu0 0.0
  %140 = vmatprep.subr.mxu0 0.0
  %141 = vmatpush1.msra.mxu0 0.0
  %142 = vmatprep.subr.mxu0 0.0
  %143 = vmatpush1.msra.mxu0 0.0
  %144 = vmatprep.subr.mxu0 0.0
  %145 = vmatpush1.msra.mxu0 0.0
  %146 = vmatprep.subr.mxu0 0.0
  %147 = vmatpush1.msra.mxu0 0.0
  %148 = vmatprep.subr.mxu0 0.0
  %149 = vmatpush1.msra.mxu0 0.0
  %150 = vmatprep.subr.mxu0 0.0
  %151 = vmatpush1.msra.mxu0 0.0
  %152 = vmatprep.subr.mxu0 0.0
  %153 = vmatpush1.msra.mxu0 0.0
  %154 = vmatprep.subr.mxu0 0.0
  %155 = vmatpush1.msra.mxu0 0.0
  %156 = vmatprep.subr.mxu0 0.0
  %157 = vmatpush1.msra.mxu0 0.0
  %158 = vmatprep.subr.mxu0 0.0
  %159 = vmatpush1.msra.mxu0 0.0
  %160 = vmatprep.subr.mxu0 0.0
  %161 = vmatpush1.msra.mxu0 0.0
  %162 = vmatprep.subr.mxu0 0.0
  %163 = vmatpush1.msra.mxu0 0.0
  %164 = vmatprep.subr.mxu0 0.0
  %165 = vmatpush1.msra.mxu0 0.0
  %166 = vmatprep.subr.mxu0 0.0
  %167 = vmatpush1.msra.mxu0 0.0
  %168 = vmatprep.subr.mxu0 0.0
  %169 = vmatpush1.msra.mxu0 0.0
  %170 = vmatprep.subr.mxu0 0.0
  %171 = vmatpush1.msra.mxu0 0.0
  %172 = vmatprep.subr.mxu0 0.0
  %173 = vmatpush1.msra.mxu0 0.0
  %174 = vmatprep.subr.mxu0 0.0
  %175 = vmatpush1.msra.mxu0 0.0
  %176 = vmatprep.subr.mxu0 0.0
  %177 = vmatpush1.msra.mxu0 0.0
  %178 = vmatprep.subr.mxu0 0.0
  %179 = vmatpush1.msra.mxu0 0.0
  %180 = vmatprep.subr.mxu0 0.0
  %181 = vmatpush1.msra.mxu0 0.0
  %182 = vmatprep.subr.mxu0 0.0
  %183 = vmatpush1.msra.mxu0 0.0
  %184 = vmatprep.subr.mxu0 0.0
  %185 = vmatpush1.msra.mxu0 0.0
  %186 = vmatprep.subr.mxu0 0.0
  %187 = vmatpush1.msra.mxu0 0.0
  %188 = vmatprep.subr.mxu0 0.0
  %189 = vmatpush1.msra.mxu0 0.0
  %190 = vmatprep.subr.mxu0 0.0
  %191 = vmatpush1.msra.mxu0 0.0
  %192 = vmatprep.mubr.f32.mxu0 0.0
  %193 = vmatmul.mubr.f32.gmra.mrb[0].mxu0 %v126
  %v194 = vpop.f32.mrb[0].mxu0
  %v195 = vadd.f32 0.0, %v194
  %v196 = vpop.f32.mrb[0].mxu0
  %197 = vdwg.mxu0
  %v199 = vrot.slane %v195, 4
  %v201 = vadd.f32 %v40, %v199
  %v202 = vtanh.pop %v201
  %v204 = vrot.slane %v202, 4
  %v205 = vsel %vm45, %v204, 0
  %207 = vmatprep.subr.mxu0 0.0
  %208 = vmatpush1.msra.mxu0 %v42
  %209 = vmatprep.subr.mxu0 0.0
  %210 = vmatpush1.msra.mxu0 %v43
  %211 = vmatprep.subr.mxu0 0.0
  %212 = vmatpush1.msra.mxu0 0.0
  %213 = vmatprep.subr.mxu0 0.0
  %214 = vmatpush1.msra.mxu0 0.0
  %215 = vmatprep.subr.mxu0 0.0
  %216 = vmatpush1.msra.mxu0 0.0
  %217 = vmatprep.subr.mxu0 0.0
  %218 = vmatpush1.msra.mxu0 0.0
  %219 = vmatprep.subr.mxu0 0.0
  %220 = vmatpush1.msra.mxu0 0.0
  %221 = vmatprep.subr.mxu0 0.0
  %222 = vmatpush1.msra.mxu0 0.0
  %223 = vmatprep.subr.mxu0 0.0
  %224 = vmatpush1.msra.mxu0 0.0
  %225 = vmatprep.subr.mxu0 0.0
  %226 = vmatpush1.msra.mxu0 0.0
  %227 = vmatprep.subr.mxu0 0.0
  %228 = vmatpush1.msra.mxu0 0.0
  %229 = vmatprep.subr.mxu0 0.0
  %230 = vmatpush1.msra.mxu0 0.0
  %231 = vmatprep.subr.mxu0 0.0
  %232 = vmatpush1.msra.mxu0 0.0
  %233 = vmatprep.subr.mxu0 0.0
  %234 = vmatpush1.msra.mxu0 0.0
  %235 = vmatprep.subr.mxu0 0.0
  %236 = vmatpush1.msra.mxu0 0.0
  %237 = vmatprep.subr.mxu0 0.0
  %238 = vmatpush1.msra.mxu0 0.0
  %239 = vmatprep.subr.mxu0 0.0
  %240 = vmatpush1.msra.mxu0 0.0
  %241 = vmatprep.subr.mxu0 0.0
  %242 = vmatpush1.msra.mxu0 0.0
  %243 = vmatprep.subr.mxu0 0.0
  %244 = vmatpush1.msra.mxu0 0.0
  %245 = vmatprep.subr.mxu0 0.0
  %246 = vmatpush1.msra.mxu0 0.0
  %247 = vmatprep.subr.mxu0 0.0
  %248 = vmatpush1.msra.mxu0 0.0
  %249 = vmatprep.subr.mxu0 0.0
  %250 = vmatpush1.msra.mxu0 0.0
  %251 = vmatprep.subr.mxu0 0.0
  %252 = vmatpush1.msra.mxu0 0.0
  %253 = vmatprep.subr.mxu0 0.0
  %254 = vmatpush1.msra.mxu0 0.0
  %255 = vmatprep.subr.mxu0 0.0
  %256 = vmatpush1.msra.mxu0 0.0
  %257 = vmatprep.subr.mxu0 0.0
  %258 = vmatpush1.msra.mxu0 0.0
  %259 = vmatprep.subr.mxu0 0.0
  %260 = vmatpush1.msra.mxu0 0.0
  %261 = vmatprep.subr.mxu0 0.0
  %262 = vmatpush1.msra.mxu0 0.0
  %263 = vmatprep.subr.mxu0 0.0
  %264 = vmatpush1.msra.mxu0 0.0
  %265 = vmatprep.subr.mxu0 0.0
  %266 = vmatpush1.msra.mxu0 0.0
  %267 = vmatprep.subr.mxu0 0.0
  %268 = vmatpush1.msra.mxu0 0.0
  %269 = vmatprep.subr.mxu0 0.0
  %270 = vmatpush1.msra.mxu0 0.0
  %271 = vmatprep.mubr.f32.mxu0 0.0
  %272 = vmatmul.mubr.f32.gmra.mrb[0].mxu0 %v205
  %v273 = vpop.f32.mrb[0].mxu0
  %v274 = vadd.f32 0.0, %v273
  %v275 = vpop.f32.mrb[0].mxu0
  %276 = vdwg.mxu0
  %v278 = vrot.slane %v274, 2
  %v280 = vadd.f32 %v40, %v278
  %v281 = vtanh.pop %v280
  %v283 = vrot.slane %v281, 6
  %v284 = vsel %vm45, %v283, 0
  %286 = vmatprep.subr.mxu0 0.0
  %287 = vmatpush1.msra.mxu0 %v42
  %288 = vmatprep.subr.mxu0 0.0
  %289 = vmatpush1.msra.mxu0 %v43
  %290 = vmatprep.subr.mxu0 0.0
  %291 = vmatpush1.msra.mxu0 0.0
  %292 = vmatprep.subr.mxu0 0.0
  %293 = vmatpush1.msra.mxu0 0.0
  %294 = vmatprep.subr.mxu0 0.0
  %295 = vmatpush1.msra.mxu0 0.0
  %296 = vmatprep.subr.mxu0 0.0
  %297 = vmatpush1.msra.mxu0 0.0
  %298 = vmatprep.subr.mxu0 0.0
  %299 = vmatpush1.msra.mxu0 0.0
  %300 = vmatprep.subr.mxu0 0.0
  %301 = vmatpush1.msra.mxu0 0.0
  %302 = vmatprep.subr.mxu0 0.0
  %303 = vmatpush1.msra.mxu0 0.0
  %304 = vmatprep.subr.mxu0 0.0
  %305 = vmatpush1.msra.mxu0 0.0
  %306 = vmatprep.subr.mxu0 0.0
  %307 = vmatpush1.msra.mxu0 0.0
  %308 = vmatprep.subr.mxu0 0.0
  %309 = vmatpush1.msra.mxu0 0.0
  %310 = vmatprep.subr.mxu0 0.0
  %311 = vmatpush1.msra.mxu0 0.0
  %312 = vmatprep.subr.mxu0 0.0
  %313 = vmatpush1.msra.mxu0 0.0
  %314 = vmatprep.subr.mxu0 0.0
  %315 = vmatpush1.msra.mxu0 0.0
  %316 = vmatprep.subr.mxu0 0.0
  %317 = vmatpush1.msra.mxu0 0.0
  %318 = vmatprep.subr.mxu0 0.0
  %319 = vmatpush1.msra.mxu0 0.0
  %320 = vmatprep.subr.mxu0 0.0
  %321 = vmatpush1.msra.mxu0 0.0
  %322 = vmatprep.subr.mxu0 0.0
  %323 = vmatpush1.msra.mxu0 0.0
  %324 = vmatprep.subr.mxu0 0.0
  %325 = vmatpush1.msra.mxu0 0.0
  %326 = vmatprep.subr.mxu0 0.0
  %327 = vmatpush1.msra.mxu0 0.0
  %328 = vmatprep.subr.mxu0 0.0
  %329 = vmatpush1.msra.mxu0 0.0
  %330 = vmatprep.subr.mxu0 0.0
  %331 = vmatpush1.msra.mxu0 0.0
  %332 = vmatprep.subr.mxu0 0.0
  %333 = vmatpush1.msra.mxu0 0.0
  %334 = vmatprep.subr.mxu0 0.0
  %335 = vmatpush1.msra.mxu0 0.0
  %336 = vmatprep.subr.mxu0 0.0
  %337 = vmatpush1.msra.mxu0 0.0
  %338 = vmatprep.subr.mxu0 0.0
  %339 = vmatpush1.msra.mxu0 0.0
  %340 = vmatprep.subr.mxu0 0.0
  %341 = vmatpush1.msra.mxu0 0.0
  %342 = vmatprep.subr.mxu0 0.0
  %343 = vmatpush1.msra.mxu0 0.0
  %344 = vmatprep.subr.mxu0 0.0
  %345 = vmatpush1.msra.mxu0 0.0
  %346 = vmatprep.subr.mxu0 0.0
  %347 = vmatpush1.msra.mxu0 0.0
  %348 = vmatprep.subr.mxu0 0.0
  %349 = vmatpush1.msra.mxu0 0.0
  %350 = vmatprep.mubr.f32.mxu0 0.0
  %351 = vmatmul.mubr.f32.gmra.mrb[0].mxu0 %v284
  %v352 = vpop.f32.mrb[0].mxu0
  %v353 = vadd.f32 0.0, %v352
  %v354 = vpop.f32.mrb[0].mxu0
  %355 = vdwg.mxu0
  %v356 = vadd.f32 %v41, %v353
  %v357 = vtanh.pop %v356
  %v359 = vsel %vm45, %v357, 0
  %361 = vmatprep.subr.mxu0 0.0
  %362 = vmatpush1.msra.mxu0 %v42
  %363 = vmatprep.subr.mxu0 0.0
  %364 = vmatpush1.msra.mxu0 %v43
  %365 = vmatprep.subr.mxu0 0.0
  %366 = vmatpush1.msra.mxu0 0.0
  %367 = vmatprep.subr.mxu0 0.0
  %368 = vmatpush1.msra.mxu0 0.0
  %369 = vmatprep.subr.mxu0 0.0
  %370 = vmatpush1.msra.mxu0 0.0
  %371 = vmatprep.subr.mxu0 0.0
  %372 = vmatpush1.msra.mxu0 0.0
  %373 = vmatprep.subr.mxu0 0.0
  %374 = vmatpush1.msra.mxu0 0.0
  %375 = vmatprep.subr.mxu0 0.0
  %376 = vmatpush1.msra.mxu0 0.0
  %377 = vmatprep.subr.mxu0 0.0
  %378 = vmatpush1.msra.mxu0 0.0
  %379 = vmatprep.subr.mxu0 0.0
  %380 = vmatpush1.msra.mxu0 0.0
  %381 = vmatprep.subr.mxu0 0.0
  %382 = vmatpush1.msra.mxu0 0.0
  %383 = vmatprep.subr.mxu0 0.0
  %384 = vmatpush1.msra.mxu0 0.0
  %385 = vmatprep.subr.mxu0 0.0
  %386 = vmatpush1.msra.mxu0 0.0
  %387 = vmatprep.subr.mxu0 0.0
  %388 = vmatpush1.msra.mxu0 0.0
  %389 = vmatprep.subr.mxu0 0.0
  %390 = vmatpush1.msra.mxu0 0.0
  %391 = vmatprep.subr.mxu0 0.0
  %392 = vmatpush1.msra.mxu0 0.0
  %393 = vmatprep.subr.mxu0 0.0
  %394 = vmatpush1.msra.mxu0 0.0
  %395 = vmatprep.subr.mxu0 0.0
  %396 = vmatpush1.msra.mxu0 0.0
  %397 = vmatprep.subr.mxu0 0.0
  %398 = vmatpush1.msra.mxu0 0.0
  %399 = vmatprep.subr.mxu0 0.0
  %400 = vmatpush1.msra.mxu0 0.0
  %401 = vmatprep.subr.mxu0 0.0
  %402 = vmatpush1.msra.mxu0 0.0
  %403 = vmatprep.subr.mxu0 0.0
  %404 = vmatpush1.msra.mxu0 0.0
  %405 = vmatprep.subr.mxu0 0.0
  %406 = vmatpush1.msra.mxu0 0.0
  %407 = vmatprep.subr.mxu0 0.0
  %408 = vmatpush1.msra.mxu0 0.0
  %409 = vmatprep.subr.mxu0 0.0
  %410 = vmatpush1.msra.mxu0 0.0
  %411 = vmatprep.subr.mxu0 0.0
  %412 = vmatpush1.msra.mxu0 0.0
  %413 = vmatprep.subr.mxu0 0.0
  %414 = vmatpush1.msra.mxu0 0.0
  %415 = vmatprep.subr.mxu0 0.0
  %416 = vmatpush1.msra.mxu0 0.0
  %417 = vmatprep.subr.mxu0 0.0
  %418 = vmatpush1.msra.mxu0 0.0
  %419 = vmatprep.subr.mxu0 0.0
  %420 = vmatpush1.msra.mxu0 0.0
  %421 = vmatprep.subr.mxu0 0.0
  %422 = vmatpush1.msra.mxu0 0.0
  %423 = vmatprep.subr.mxu0 0.0
  %424 = vmatpush1.msra.mxu0 0.0
  %425 = vmatprep.mubr.f32.mxu0 0.0
  %426 = vmatmul.mubr.f32.gmra.mrb[0].mxu0 %v359
  %v427 = vpop.f32.mrb[0].mxu0
  %v428 = vadd.f32 0.0, %v427
  %v429 = vpop.f32.mrb[0].mxu0
  %430 = vdwg.mxu0
  %v432 = vrot.slane %v428, 6
  %v434 = vadd.f32 %v41, %v432
  %v435 = vtanh.pop %v434
  %v437 = vrot.slane %v435, 2
  %v438 = vsel %vm45, %v437, 0
  %440 = vmatprep.subr.mxu0 0.0
  %441 = vmatpush1.msra.mxu0 %v42
  %442 = vmatprep.subr.mxu0 0.0
  %443 = vmatpush1.msra.mxu0 %v43
  %444 = vmatprep.subr.mxu0 0.0
  %445 = vmatpush1.msra.mxu0 0.0
  %446 = vmatprep.subr.mxu0 0.0
  %447 = vmatpush1.msra.mxu0 0.0
  %448 = vmatprep.subr.mxu0 0.0
  %449 = vmatpush1.msra.mxu0 0.0
  %450 = vmatprep.subr.mxu0 0.0
  %451 = vmatpush1.msra.mxu0 0.0
  %452 = vmatprep.subr.mxu0 0.0
  %453 = vmatpush1.msra.mxu0 0.0
  %454 = vmatprep.subr.mxu0 0.0
  %455 = vmatpush1.msra.mxu0 0.0
  %456 = vmatprep.subr.mxu0 0.0
  %457 = vmatpush1.msra.mxu0 0.0
  %458 = vmatprep.subr.mxu0 0.0
  %459 = vmatpush1.msra.mxu0 0.0
  %460 = vmatprep.subr.mxu0 0.0
  %461 = vmatpush1.msra.mxu0 0.0
  %462 = vmatprep.subr.mxu0 0.0
  %463 = vmatpush1.msra.mxu0 0.0
  %464 = vmatprep.subr.mxu0 0.0
  %465 = vmatpush1.msra.mxu0 0.0
  %466 = vmatprep.subr.mxu0 0.0
  %467 = vmatpush1.msra.mxu0 0.0
  %468 = vmatprep.subr.mxu0 0.0
  %469 = vmatpush1.msra.mxu0 0.0
  %470 = vmatprep.subr.mxu0 0.0
  %471 = vmatpush1.msra.mxu0 0.0
  %472 = vmatprep.subr.mxu0 0.0
  %473 = vmatpush1.msra.mxu0 0.0
  %474 = vmatprep.subr.mxu0 0.0
  %475 = vmatpush1.msra.mxu0 0.0
  %476 = vmatprep.subr.mxu0 0.0
  %477 = vmatpush1.msra.mxu0 0.0
  %478 = vmatprep.subr.mxu0 0.0
  %479 = vmatpush1.msra.mxu0 0.0
  %480 = vmatprep.subr.mxu0 0.0
  %481 = vmatpush1.msra.mxu0 0.0
  %482 = vmatprep.subr.mxu0 0.0
  %483 = vmatpush1.msra.mxu0 0.0
  %484 = vmatprep.subr.mxu0 0.0
  %485 = vmatpush1.msra.mxu0 0.0
  %486 = vmatprep.subr.mxu0 0.0
  %487 = vmatpush1.msra.mxu0 0.0
  %488 = vmatprep.subr.mxu0 0.0
  %489 = vmatpush1.msra.mxu0 0.0
  %490 = vmatprep.subr.mxu0 0.0
  %491 = vmatpush1.msra.mxu0 0.0
  %492 = vmatprep.subr.mxu0 0.0
  %493 = vmatpush1.msra.mxu0 0.0
  %494 = vmatprep.subr.mxu0 0.0
  %495 = vmatpush1.msra.mxu0 0.0
  %496 = vmatprep.subr.mxu0 0.0
  %497 = vmatpush1.msra.mxu0 0.0
  %498 = vmatprep.subr.mxu0 0.0
  %499 = vmatpush1.msra.mxu0 0.0
  %500 = vmatprep.subr.mxu0 0.0
  %501 = vmatpush1.msra.mxu0 0.0
  %502 = vmatprep.subr.mxu0 0.0
  %503 = vmatpush1.msra.mxu0 0.0
  %504 = vmatprep.mubr.f32.mxu0 0.0
  %505 = vmatmul.mubr.f32.gmra.mrb[0].mxu0 %v438
  %v506 = vpop.f32.mrb[0].mxu0
  %v507 = vadd.f32 0.0, %v506
  %v508 = vpop.f32.mrb[0].mxu0
  %509 = vdwg.mxu0
  %v511 = vrot.slane %v507, 4
  %v513 = vadd.f32 %v41, %v511
  %v514 = vtanh.pop %v513
  %v516 = vrot.slane %v514, 4
  %v517 = vsel %vm45, %v516, 0
  %519 = vmatprep.subr.mxu0 0.0
  %520 = vmatpush1.msra.mxu0 %v42
  %521 = vmatprep.subr.mxu0 0.0
  %522 = vmatpush1.msra.mxu0 %v43
  %523 = vmatprep.subr.mxu0 0.0
  %524 = vmatpush1.msra.mxu0 0.0
  %525 = vmatprep.subr.mxu0 0.0
  %526 = vmatpush1.msra.mxu0 0.0
  %527 = vmatprep.subr.mxu0 0.0
  %528 = vmatpush1.msra.mxu0 0.0
  %529 = vmatprep.subr.mxu0 0.0
  %530 = vmatpush1.msra.mxu0 0.0
  %531 = vmatprep.subr.mxu0 0.0
  %532 = vmatpush1.msra.mxu0 0.0
  %533 = vmatprep.subr.mxu0 0.0
  %534 = vmatpush1.msra.mxu0 0.0
  %535 = vmatprep.subr.mxu0 0.0
  %536 = vmatpush1.msra.mxu0 0.0
  %537 = vmatprep.subr.mxu0 0.0
  %538 = vmatpush1.msra.mxu0 0.0
  %539 = vmatprep.subr.mxu0 0.0
  %540 = vmatpush1.msra.mxu0 0.0
  %541 = vmatprep.subr.mxu0 0.0
  %542 = vmatpush1.msra.mxu0 0.0
  %543 = vmatprep.subr.mxu0 0.0
  %544 = vmatpush1.msra.mxu0 0.0
  %545 = vmatprep.subr.mxu0 0.0
  %546 = vmatpush1.msra.mxu0 0.0
  %547 = vmatprep.subr.mxu0 0.0
  %548 = vmatpush1.msra.mxu0 0.0
  %549 = vmatprep.subr.mxu0 0.0
  %550 = vmatpush1.msra.mxu0 0.0
  %551 = vmatprep.subr.mxu0 0.0
  %552 = vmatpush1.msra.mxu0 0.0
  %553 = vmatprep.subr.mxu0 0.0
  %554 = vmatpush1.msra.mxu0 0.0
  %555 = vmatprep.subr.mxu0 0.0
  %556 = vmatpush1.msra.mxu0 0.0
  %557 = vmatprep.subr.mxu0 0.0
  %558 = vmatpush1.msra.mxu0 0.0
  %559 = vmatprep.subr.mxu0 0.0
  %560 = vmatpush1.msra.mxu0 0.0
  %561 = vmatprep.subr.mxu0 0.0
  %562 = vmatpush1.msra.mxu0 0.0
  %563 = vmatprep.subr.mxu0 0.0
  %564 = vmatpush1.msra.mxu0 0.0
  %565 = vmatprep.subr.mxu0 0.0
  %566 = vmatpush1.msra.mxu0 0.0
  %567 = vmatprep.subr.mxu0 0.0
  %568 = vmatpush1.msra.mxu0 0.0
  %569 = vmatprep.subr.mxu0 0.0
  %570 = vmatpush1.msra.mxu0 0.0
  %571 = vmatprep.subr.mxu0 0.0
  %572 = vmatpush1.msra.mxu0 0.0
  %573 = vmatprep.subr.mxu0 0.0
  %574 = vmatpush1.msra.mxu0 0.0
  %575 = vmatprep.subr.mxu0 0.0
  %576 = vmatpush1.msra.mxu0 0.0
  %577 = vmatprep.subr.mxu0 0.0
  %578 = vmatpush1.msra.mxu0 0.0
  %579 = vmatprep.subr.mxu0 0.0
  %580 = vmatpush1.msra.mxu0 0.0
  %581 = vmatprep.subr.mxu0 0.0
  %582 = vmatpush1.msra.mxu0 0.0
  %583 = vmatprep.mubr.f32.mxu0 0.0
  %584 = vmatmul.mubr.f32.gmra.mrb[0].mxu0 %v517
  %v585 = vpop.f32.mrb[0].mxu0
  %v586 = vadd.f32 0.0, %v585
  %v587 = vpop.f32.mrb[0].mxu0
  %588 = vdwg.mxu0
  %v590 = vrot.slane %v586, 2
  %v592 = vadd.f32 %v41, %v590
  %v593 = vtanh.pop %v592
  %v594 = vlaneseq
  %v595 = vshrl.u32 %v594, 7
  %v596 = vsub.s32 0, %v595
  %v597 = vrot.slane %v16, %v596
  %v598 = vmul.f32 %v593, %v597
  %vm599 = vcmask 130054
  %v600 = vsel %vm599, %v598, 0.0
  %601 = vadd.xlane.f32.xlu0 %v600
  %v602 = vpop.xlane.xlu0 %601
  %v603 = vlaneseq
  %v604 = vshrl.u32 %v603, 7
  %v605 = vsub.s32 0, %v604
  %v606 = vrot.slane %v17, %v605
  %v607 = vadd.f32 %v602, %v606
  %vm608 = vcmask 7174
  %609 = vst.msk [vmem:[%s3 - $0x6] sm:$0xc0] %vm608, %v607
  // Predicated region
  $region14: #{simple_rnn_forward.1} parent=0 // pred_check
    _
  $region15: #{simple_rnn_forward.1} parent=0 // pred_check_branch
    %611 = sbr.rel (0) target = $region17
  $region16: #{simple_rnn_forward.1} parent=0 // pred_region
    _
  $region17: #{simple_rnn_forward.1} parent=0 // pred_fallthru
    _
  // Predicated region
  $region18: #{simple_rnn_forward.1} parent=0 // pred_check
    _
  $region19: #{simple_rnn_forward.1} parent=0 // pred_check_branch
    %613 = sbr.rel (0) target = $region21
  $region20: #{simple_rnn_forward.1} parent=0 // pred_region
    _
  $region21: #{simple_rnn_forward.1} parent=0 // pred_fallthru
    _

</llo_original>
